<compile_context>
chip_gen: v5e
topology: v5e:2x2
jax: 0.10.0
libtpu: 0.0.40
codegen_flags: <defaults>
</compile_context>

<pallas_src>
import jax
import jax.numpy as jnp
from jax.experimental import pallas as pl
from jax.experimental.pallas import tpu as pltpu

LANE = 128
SUBLANE = 8


def _round_up(x, m):
    return ((x + m - 1) // m) * m


# ----------------------------------------------------------------------------
# Pallas kernel: LSTM cell step on pre-gathered input projections.
#   gates = x_proj (= E[ids] @ W_ih^T + b, gathered in wrapper)
#         + h @ W_hh^T                       (bf16 operands, f32 accum)
#   i, f, g, o = lane-aligned splits of gates (PyTorch gate order)
#   c' = f*c + i*g ;  h' = o*tanh(c')
# ----------------------------------------------------------------------------
def lstm_cell_kernel(xproj_ref, h_ref, c_ref, w_hh_ref, h_out_ref, c_out_ref):
    Hp = h_ref.shape[-1]

    gates = xproj_ref[...] + jnp.dot(
        h_ref[...].astype(jnp.bfloat16), w_hh_ref[...],
        preferred_element_type=jnp.float32)                       # (TN, 4*Hp)

    # Gate slices are exact multiples of 128 lanes -> free vreg-boundary slices.
    # Note: activations also run on padded lanes (zeros); for H << 128 this is
    # wasted EUP work but keeps full-vreg stores and zero-preserving padding.
    i_g = jax.nn.sigmoid(gates[:, 0 * Hp:1 * Hp])
    f_g = jax.nn.sigmoid(gates[:, 1 * Hp:2 * Hp])
    g_g = jnp.tanh(gates[:, 2 * Hp:3 * Hp])
    o_g = jax.nn.sigmoid(gates[:, 3 * Hp:4 * Hp])

    c_new = f_g * c_ref[...] + i_g * g_g
    h_new = o_g * jnp.tanh(c_new)

    h_out_ref[...] = h_new
    c_out_ref[...] = c_new


# ----------------------------------------------------------------------------
# One-time parameter preparation (hoisted out of the per-call path).
# ----------------------------------------------------------------------------
def _gate_pad_cols(w_t, H, Hp):
    """(in_dim, 4H) -> (in_dim, 4*Hp): pad each H-wide gate block to Hp lanes."""
    in_dim = w_t.shape[0]
    out = jnp.zeros((in_dim, 4, Hp), w_t.dtype)
    out = out.at[:, :, :H].set(w_t.reshape(in_dim, 4, H))
    return out.reshape(in_dim, 4 * Hp)


def prepare_params(raw):
    emb = raw["embedding"].astype(jnp.float32)            # (V, H)
    w_ih = raw["w_ih"].astype(jnp.float32)                # (4H, H)
    w_hh = raw["w_hh"].astype(jnp.float32)                # (4H, H)
    b = (raw["b_ih"] + raw["b_hh"]).astype(jnp.float32)   # (4H,)

    V, H = emb.shape
    Hp = _round_up(H, LANE)

    bias = jnp.zeros((4, Hp), jnp.float32).at[:, :H].set(
        b.reshape(4, H)).reshape(1, 4 * Hp)                        # (1, 4*Hp)

    # Fold embedding AND bias into the gathered input projection table:
    # each token row is used exactly once per step, so adding the bias here is
    # exact and deletes a resident operand + a per-step broadcast add.
    w_ov_b = emb @ _gate_pad_cols(w_ih.T, H, Hp) + bias            # (V, 4*Hp) f32

    # Recurrent weight: resident bf16 matmul operand, f32 accumulation in-kernel.
    w_hh_t = jnp.zeros((Hp, 4 * Hp), jnp.float32).at[:H].set(
        _gate_pad_cols(w_hh.T, H, Hp)).astype(jnp.bfloat16)        # (Hp, 4*Hp)

    return {"w_ov_b": w_ov_b, "w_hh_t": w_hh_t, "V": V, "H": H, "Hp": Hp}


# ----------------------------------------------------------------------------
# Padded-layout core: ONLY the pallas_call, no pad/slice glue.  A decode loop
# should keep (x_pad, h_pad, c_pad) in this layout across calls.
# ----------------------------------------------------------------------------
def _lstm_step_padded(prep, x_pad, h_pad, c_pad, *, tile_n):
    Np, Hp = h_pad.shape
    grid = (Np // tile_n,)

    row_spec = pl.BlockSpec((tile_n, Hp), lambda i: (i, 0))
    gate_row_spec = pl.BlockSpec((tile_n, 4 * Hp), lambda i: (i, 0))

    cost = pl.CostEstimate(
        flops=2 * Np * Hp * 4 * Hp + 10 * Np * Hp,
        transcendentals=5 * Np * Hp,
        bytes_accessed=(x_pad.size * 4 + 4 * Np * Hp * 4          # x, h, c, outs
                        + prep["w_hh_t"].size * 2))

    return pl.pallas_call(
        lstm_cell_kernel,
        out_shape=(jax.ShapeDtypeStruct((Np, Hp), jnp.float32),
                   jax.ShapeDtypeStruct((Np, Hp), jnp.float32)),
        grid=grid,
        in_specs=[
            gate_row_spec,                                    # gathered x@W_ih^T + b
            row_spec,                                         # h tile
            row_spec,                                         # c tile
            pl.BlockSpec((Hp, 4 * Hp), lambda i: (0, 0)),     # W_hh^T (VMEM-resident)
        ],
        out_specs=(row_spec, row_spec),
        input_output_aliases={1: 0, 2: 1},                    # h->h_n, c->c_n in place
        compiler_params=pltpu.CompilerParams(
            dimension_semantics=("parallel",)),
        cost_estimate=cost,
    )(x_pad, h_pad, c_pad, prep["w_hh_t"])


# ----------------------------------------------------------------------------
# Encoder forward with the PyTorch-shaped API (pad/slice convenience wrapper).
# On v7x prefer max_tile_n=256 so large N gives >=2 grid steps (2 TensorCores);
# on v5e/v6e keep one large tile (512-1024) to amortize per-step overhead.
# ----------------------------------------------------------------------------
def encoder_forward(prep, input_seq, hidden, *, max_tile_n=512):
    """input_seq: (N,) int32 token ids.  hidden = (h0, c0), each (1, N, H)."""
    h0, c0 = hidden
    N = input_seq.shape[0]
    H, Hp, V = prep["H"], prep["Hp"], prep["V"]

    # Embedding + input projection + bias as ONE row gather of the folded table.
    ids = jnp.clip(input_seq.astype(jnp.int32), 0, V - 1)
    x_proj = jnp.take(prep["w_ov_b"], ids, axis=0)                 # (N, 4*Hp)

    # Tile the token/batch dimension (sublane-aligned rows, lane-dense cols).
    n8 = _round_up(max(N, 1), SUBLANE)
    TN = min(max_tile_n, n8)
    Np = _round_up(n8, TN)

    x_pad = jnp.zeros((Np, 4 * Hp), jnp.float32).at[:N].set(x_proj)
    h_pad = jnp.zeros((Np, Hp), jnp.float32).at[:N, :H].set(h0.reshape(N, H))
    c_pad = jnp.zeros((Np, Hp), jnp.float32).at[:N, :H].set(c0.reshape(N, H))

    h_out, c_out = _lstm_step_padded(prep, x_pad, h_pad, c_pad, tile_n=TN)

    h_n = h_out[:N, :H].reshape(1, N, H)
    c_n = c_out[:N, :H].reshape(1, N, H)
    output = h_n                                            # seq_len == 1
    return output, (h_n, c_n)


# ----------------------------------------------------------------------------
# Pure-JAX reference (matches the PyTorch Encoder forward).
# ----------------------------------------------------------------------------
def encoder_forward_ref(raw, input_seq, hidden):
    h0, c0 = hidden
    N = input_seq.shape[0]
    H = raw["w_hh"].shape[1]
    x = jnp.take(raw["embedding"], input_seq, axis=0)
    h = h0.reshape(N, H)
    c = c0.reshape(N, H)
    gates = x @ raw["w_ih"].T + h @ raw["w_hh"].T + raw["b_ih"] + raw["b_hh"]
    i_g = jax.nn.sigmoid(gates[:, 0 * H:1 * H])
    f_g = jax.nn.sigmoid(gates[:, 1 * H:2 * H])
    g_g = jnp.tanh(gates[:, 2 * H:3 * H])
    o_g = jax.nn.sigmoid(gates[:, 3 * H:4 * H])
    c_new = f_g * c + i_g * g_g
    h_new = o_g * jnp.tanh(c_new)
    return (h_new.reshape(1, N, H),
            (h_new.reshape(1, N, H), c_new.reshape(1, N, H)))


if __name__ == "__main__":
    hidden_size = 20
    source = "my name is yogesh sharma"
    # source_vec = [[0, 1, 2, 3, 4]] as in the PyTorch script
    source_vec = jnp.array([[i for i, _ in enumerate(source.split())]],
                           dtype=jnp.int32)
    input_size = source_vec.shape[1]          # 5 tokens in vocabulary
    N, H = input_size, hidden_size

    key = jax.random.PRNGKey(0)
    k_emb, k_wih, k_whh, k_bih, k_bhh, k_h, k_c = jax.random.split(key, 7)
    raw = {
        "embedding": jax.random.normal(k_emb, (input_size, H), jnp.float32),
        "w_ih": jax.random.normal(k_wih, (4 * H, H), jnp.float32) * 0.1,
        "w_hh": jax.random.normal(k_whh, (4 * H, H), jnp.float32) * 0.1,
        "b_ih": jax.random.normal(k_bih, (4 * H,), jnp.float32) * 0.1,
        "b_hh": jax.random.normal(k_bhh, (4 * H,), jnp.float32) * 0.1,
    }

    input_seq = source_vec[0]                                   # (N,)
    # Non-zero initial state so the W_hh path is exercised by the check.
    h0 = jax.random.normal(k_h, (1, N, H), jnp.float32) * 0.1
    c0 = jax.random.normal(k_c, (1, N, H), jnp.float32) * 0.1

    prep = prepare_params(raw)        # one-time init cost, not per-call glue

    output, (h_n, c_n) = encoder_forward(prep, input_seq, (h0, c0))
    jax.block_until_ready((output, h_n, c_n))

    out_ref, (h_ref_, c_ref_) = encoder_forward_ref(raw, input_seq, (h0, c0))
    assert output.shape == (1, N, H) and h_n.shape == (1, N, H) and c_n.shape == (1, N, H)
    # Tolerance loosened vs. full-f32: recurrent matmul operands are bf16
    # (f32 accumulation), per the performance review.
    assert jnp.allclose(output, out_ref, atol=2e-3)
    assert jnp.allclose(h_n, h_ref_, atol=2e-3)
    assert jnp.allclose(c_n, c_ref_, atol=2e-3)

    print("KERNEL_OK")
</pallas_src>

<mosaic_0001>
module attributes {stable_mosaic.version = 11 : i64} {
  func.func @lstm_cell_kernel(%arg0: i32, %arg1: memref<8x512xf32, #tpu.memory_space<vmem>>, %arg2: memref<8x128xf32, #tpu.memory_space<vmem>>, %arg3: memref<8x128xf32, #tpu.memory_space<vmem>>, %arg4: memref<128x512xbf16, #tpu.memory_space<vmem>>, %arg5: memref<8x128xf32, #tpu.memory_space<vmem>>, %arg6: memref<8x128xf32, #tpu.memory_space<vmem>>) attributes {dimension_semantics = [#tpu.dimension_semantics<parallel>], iteration_bounds = array<i64: 1>, scalar_prefetch = 0 : i64, scratch_operands = 0 : i64, tpu.core_type = #tpu.core_type<tc>, window_params = [{transform_indices = @transform_0, window_bounds = array<i64: 8, 512>}, {transform_indices = @transform_1, window_bounds = array<i64: 8, 128>}, {transform_indices = @transform_2, window_bounds = array<i64: 8, 128>}, {pipeline_mode = #tpu.pipeline_mode<synchronous>, transform_indices = @transform_3, window_bounds = array<i64: 128, 512>}, {transform_indices = @transform_4, window_bounds = array<i64: 8, 128>}, {transform_indices = @transform_5, window_bounds = array<i64: 8, 128>}]} {
    %c0 = arith.constant 0 : index
    %c0_0 = arith.constant 0 : index
    %0 = vector.load %arg1[%c0, %c0_0] : memref<8x512xf32, #tpu.memory_space<vmem>>, vector<8x512xf32>
    %c0_1 = arith.constant 0 : index
    %c0_2 = arith.constant 0 : index
    %1 = vector.load %arg2[%c0_1, %c0_2] : memref<8x128xf32, #tpu.memory_space<vmem>>, vector<8x128xf32>
    %2 = arith.truncf %1 : vector<8x128xf32> to vector<8x128xbf16>
    %c0_3 = arith.constant 0 : index
    %c0_4 = arith.constant 0 : index
    %3 = vector.load %arg4[%c0_3, %c0_4] : memref<128x512xbf16, #tpu.memory_space<vmem>>, vector<128x512xbf16>
    %cst = arith.constant dense<0.000000e+00> : vector<8x512xf32>
    %4 = tpu.matmul %2, %3, %cst {dimension_numbers = #tpu.dot_dimension_numbers<[1], [0], [0], [1], [0, 0, 1, 1], [], []>} : vector<8x128xbf16>, vector<128x512xbf16>, vector<8x512xf32> -> vector<8x512xf32>
    %5 = arith.addf %0, %4 : vector<8x512xf32>
    %6 = vector.extract_strided_slice %5 {offsets = [0, 0], sizes = [8, 128], strides = [1, 1]} : vector<8x512xf32> to vector<8x128xf32>
    %7 = arith.negf %6 : vector<8x128xf32>
    %8 = math.exp %7 : vector<8x128xf32>
    %cst_5 = arith.constant 1.000000e+00 : f32
    %9 = vector.broadcast %cst_5 : f32 to vector<8x128xf32>
    %10 = arith.addf %9, %8 : vector<8x128xf32>
    %11 = arith.divf %9, %10 : vector<8x128xf32>
    %12 = vector.extract_strided_slice %5 {offsets = [0, 128], sizes = [8, 128], strides = [1, 1]} : vector<8x512xf32> to vector<8x128xf32>
    %13 = arith.negf %12 : vector<8x128xf32>
    %14 = math.exp %13 : vector<8x128xf32>
    %cst_6 = arith.constant 1.000000e+00 : f32
    %15 = vector.broadcast %cst_6 : f32 to vector<8x128xf32>
    %16 = arith.addf %15, %14 : vector<8x128xf32>
    %17 = arith.divf %15, %16 : vector<8x128xf32>
    %18 = vector.extract_strided_slice %5 {offsets = [0, 256], sizes = [8, 128], strides = [1, 1]} : vector<8x512xf32> to vector<8x128xf32>
    %19 = math.tanh %18 : vector<8x128xf32>
    %20 = vector.extract_strided_slice %5 {offsets = [0, 384], sizes = [8, 128], strides = [1, 1]} : vector<8x512xf32> to vector<8x128xf32>
    %21 = arith.negf %20 : vector<8x128xf32>
    %22 = math.exp %21 : vector<8x128xf32>
    %cst_7 = arith.constant 1.000000e+00 : f32
    %23 = vector.broadcast %cst_7 : f32 to vector<8x128xf32>
    %24 = arith.addf %23, %22 : vector<8x128xf32>
    %25 = arith.divf %23, %24 : vector<8x128xf32>
    %c0_8 = arith.constant 0 : index
    %c0_9 = arith.constant 0 : index
    %26 = vector.load %arg3[%c0_8, %c0_9] : memref<8x128xf32, #tpu.memory_space<vmem>>, vector<8x128xf32>
    %27 = arith.mulf %17, %26 : vector<8x128xf32>
    %28 = arith.mulf %11, %19 : vector<8x128xf32>
    %29 = arith.addf %27, %28 : vector<8x128xf32>
    %30 = math.tanh %29 : vector<8x128xf32>
    %31 = arith.mulf %25, %30 : vector<8x128xf32>
    %c0_10 = arith.constant 0 : index
    %c0_11 = arith.constant 0 : index
    %32 = vector.load %arg5[%c0_10, %c0_11] : memref<8x128xf32, #tpu.memory_space<vmem>>, vector<8x128xf32>
    tpu.vector_store %arg5[%c0_10, %c0_11], %31 {strides = array<i32>} : memref<8x128xf32, #tpu.memory_space<vmem>>, vector<8x128xf32>,
    %c0_12 = arith.constant 0 : index
    %c0_13 = arith.constant 0 : index
    %33 = vector.load %arg6[%c0_12, %c0_13] : memref<8x128xf32, #tpu.memory_space<vmem>>, vector<8x128xf32>
    tpu.vector_store %arg6[%c0_12, %c0_13], %29 {strides = array<i32>} : memref<8x128xf32, #tpu.memory_space<vmem>>, vector<8x128xf32>,
    return
  }
  func.func @transform_0(%arg0: i32) -> (i32, i32) {
    %c0_i32 = arith.constant 0 : i32
    %c0_i32_0 = arith.constant 0 : i32
    return %arg0, %c0_i32 : i32, i32
  }
  func.func @transform_1(%arg0: i32) -> (i32, i32) {
    %c0_i32 = arith.constant 0 : i32
    %c0_i32_0 = arith.constant 0 : i32
    return %arg0, %c0_i32 : i32, i32
  }
  func.func @transform_2(%arg0: i32) -> (i32, i32) {
    %c0_i32 = arith.constant 0 : i32
    %c0_i32_0 = arith.constant 0 : i32
    return %arg0, %c0_i32 : i32, i32
  }
  func.func @transform_3(%arg0: i32) -> (i32, i32) {
    %c0_i32 = arith.constant 0 : i32
    %c0_i32_0 = arith.constant 0 : i32
    %c0_i32_1 = arith.constant 0 : i32
    return %c0_i32, %c0_i32_0 : i32, i32
  }
  func.func @transform_4(%arg0: i32) -> (i32, i32) {
    %c0_i32 = arith.constant 0 : i32
    %c0_i32_0 = arith.constant 0 : i32
    return %arg0, %c0_i32 : i32, i32
  }
  func.func @transform_5(%arg0: i32) -> (i32, i32) {
    %c0_i32 = arith.constant 0 : i32
    %c0_i32_0 = arith.constant 0 : i32
    return %arg0, %c0_i32 : i32, i32
  }
}

</mosaic_0001>

<llo_original>
// kernel: tpu_custom_call.1
$region0: #{tpu_custom_call.1}
  #allocation0 [shape = 'u32[]', space=smem, size = 0x4, offset = 0x4, fixed_abs, tag = 'smem constant byte address 0x4 - core index']
  #allocation1 [shape = 'u32[72,128]{1,0:T(1,128)}', space=vmem, size = 0x9000, scoped, tag = 'internal scratch']
  %s0 = inlined_call_operand.vmem [shape: f32[8,512], index: 0, kind: input, shape index: {}]
  %s1 = inlined_call_operand.hbm [shape: f32[8,128], index: 1, kind: input, shape index: {}, may-alias: {1,4}]
  %s2 = inlined_call_operand.hbm [shape: f32[8,128], index: 2, kind: input, shape index: {}, may-alias: {2,5}]
  %s3 = inlined_call_operand.hbm [shape: bf16[128,512], index: 3, kind: input, shape index: {}]
  %s4 = inlined_call_operand.hbm [shape: f32[8,128], index: 4, kind: output, shape index: {0}, may-alias: {1,4}]
  %s5 = inlined_call_operand.hbm [shape: f32[8,128], index: 5, kind: output, shape index: {1}, may-alias: {2,5}]
  %6 = xla_tuple %s4, %s5
  %s7 = sld [smem:[#allocation0]]
  $region46: #{tpu_custom_call.1} parent=0
    _
  %s9 = ssub.s32 1, %s7
  %s10 = scalar_select 0, %s9, %s7
  $region1: #{tpu_custom_call.1} parent=0
    #allocation2 [shape = 'u8[4096]{0}', space=vmem, size = 0x1000, scoped, tag = 'input window, operand 1, single buffered']
    #allocation3 [shape = 's32[1]{0}', space=sflag, size = 0x4, scoped, tag = 'scoped memory for tpu_custom_call.1']
    #allocation4 [shape = 's32[1]{0}', space=sflag, size = 0x4, scoped, tag = 'scoped memory for tpu_custom_call.1']
    #allocation5 [shape = 'u8[4096]{0}', space=vmem, size = 0x1000, scoped, tag = 'input window, operand 2, single buffered']
    #allocation6 [shape = 's32[1]{0}', space=sflag, size = 0x4, scoped, tag = 'scoped memory for tpu_custom_call.1']
    #allocation7 [shape = 'u8[131072]{0}', space=vmem, size = 0x20000, scoped, tag = 'input window, operand 3, single buffered']
    #allocation8 [shape = 'u8[4096]{0}', space=vmem, size = 0x1000, scoped, tag = 'output window, operand 0, single buffered']
    #allocation9 [shape = 'u8[4096]{0}', space=vmem, size = 0x1000, scoped, tag = 'output window, operand 1, single buffered']
    #allocation10 [shape = 's32[1]{0}', space=sflag, size = 0x4, scoped, tag = 'scoped memory for tpu_custom_call.1']
    %11 = vsyncpa [#allocation3], 0
    %12 = vsyncpa [#allocation6], 0
    %13 = vsyncpa [#allocation4], 0
    %14 = vsyncpa [#allocation10], 0
    // Predicated region
    $region2: #{tpu_custom_call.1} parent=1 // pred_check
      _
    $region3: #{tpu_custom_call.1} parent=1 // pred_check_branch
      %16 = sbr.rel (0) target = $region5
    $region4: #{tpu_custom_call.1} parent=1 // pred_region
      _
    $region5: #{tpu_custom_call.1} parent=1 // pred_fallthru
      _
    // Predicated region
    $region6: #{tpu_custom_call.1} parent=1 // pred_check
      _
    $region7: #{tpu_custom_call.1} parent=1 // pred_check_branch
      %18 = sbr.rel (0) target = $region9
    $region8: #{tpu_custom_call.1} parent=1 // pred_region
      %20 = vsyncadd [#allocation3], 0
      %s22 = sshll.u32 %s1, 4
      %s23 = int_to_ptr.hbm [resolvable:$true] %s22
      %s24 = sshll.u32 [#allocation2], 4
      %s25 = int_to_ptr.vmem [resolvable:$true] %s24
      %27 = dma.hbm_to_vmem [thread:$0]  %s23, 128, %s25, [#allocation3]
    $region9: #{tpu_custom_call.1} parent=1 // pred_fallthru
      _
    // Predicated region
    $region10: #{tpu_custom_call.1} parent=1 // pred_check
      _
    $region11: #{tpu_custom_call.1} parent=1 // pred_check_branch
      %29 = sbr.rel (0) target = $region13
    $region12: #{tpu_custom_call.1} parent=1 // pred_region
      %31 = vsyncadd [#allocation6], 0
      %s33 = sshll.u32 %s2, 4
      %s34 = int_to_ptr.hbm [resolvable:$true] %s33
      %s35 = sshll.u32 [#allocation5], 4
      %s36 = int_to_ptr.vmem [resolvable:$true] %s35
      %38 = dma.hbm_to_vmem [thread:$0]  %s34, 128, %s36, [#allocation6]
    $region13: #{tpu_custom_call.1} parent=1 // pred_fallthru
      _
    // Predicated region
    $region14: #{tpu_custom_call.1} parent=1 // pred_check
      _
    $region15: #{tpu_custom_call.1} parent=1 // pred_check_branch
      %40 = sbr.rel (0) target = $region17
    $region16: #{tpu_custom_call.1} parent=1 // pred_region
      %42 = vsyncadd [#allocation6], 0
      %s43 = sshll.u32 %s3, 4
      %s44 = int_to_ptr.hbm [resolvable:$true] %s43
      %s45 = sshll.u32 [#allocation7], 4
      %s46 = int_to_ptr.vmem [resolvable:$true] %s45
      %51 = dma.hbm_to_vmem [thread:$0]  %s44, 4096, %s46, [#allocation6], 256, 256, 16
    $region17: #{tpu_custom_call.1} parent=1 // pred_fallthru
      _
    // Predicated region
    $region18: #{tpu_custom_call.1} parent=1 // pred_check
      _
    $region19: #{tpu_custom_call.1} parent=1 // pred_check_branch
      %53 = sbr.rel (0) target = $region21
    $region20: #{tpu_custom_call.1} parent=1 // pred_region
      %55 = dma.done [#allocation3], 128
    $region21: #{tpu_custom_call.1} parent=1 // pred_fallthru
      _
    // Predicated region
    $region22: #{tpu_custom_call.1} parent=1 // pred_check
      _
    $region23: #{tpu_custom_call.1} parent=1 // pred_check_branch
      %57 = sbr.rel (0) target = $region25
    $region24: #{tpu_custom_call.1} parent=1 // pred_region
      %59 = dma.done [#allocation6], 128
    $region25: #{tpu_custom_call.1} parent=1 // pred_fallthru
      _
    // Predicated region
    $region26: #{tpu_custom_call.1} parent=1 // pred_check
      _
    $region27: #{tpu_custom_call.1} parent=1 // pred_check_branch
      %61 = sbr.rel (0) target = $region29
    $region28: #{tpu_custom_call.1} parent=1 // pred_region
      %63 = dma.done [#allocation6], 4096
    $region29: #{tpu_custom_call.1} parent=1 // pred_fallthru
      _
    %v64 = vld [vmem:[%s0] sm:$0xff]
    %v65 = vld [vmem:[%s0 + $0x8] sm:$0xff]
    %v66 = vld [vmem:[%s0 + $0x10] sm:$0xff]
    %v67 = vld [vmem:[%s0 + $0x18] sm:$0xff]
    %v68 = vld [vmem:[#allocation2] sm:$0xff]
    %v69 = vpack.c.bf16 %v68, %v68
    %v70 = vld [vmem:[#allocation7] sm:$0xff]
    %v71 = vld [vmem:[#allocation7 + $0x8] sm:$0xff]
    %v72 = vld [vmem:[#allocation7 + $0x10] sm:$0xff]
    %v73 = vld [vmem:[#allocation7 + $0x18] sm:$0xff]
    %v74 = vld [vmem:[#allocation7 + $0x20] sm:$0xff]
    %v75 = vld [vmem:[#allocation7 + $0x28] sm:$0xff]
    %v76 = vld [vmem:[#allocation7 + $0x30] sm:$0xff]
    %v77 = vld [vmem:[#allocation7 + $0x38] sm:$0xff]
    %v78 = vld [vmem:[#allocation7 + $0x40] sm:$0xff]
    %v79 = vld [vmem:[#allocation7 + $0x48] sm:$0xff]
    %v80 = vld [vmem:[#allocation7 + $0x50] sm:$0xff]
    %v81 = vld [vmem:[#allocation7 + $0x58] sm:$0xff]
    %v82 = vld [vmem:[#allocation7 + $0x60] sm:$0xff]
    %v83 = vld [vmem:[#allocation7 + $0x68] sm:$0xff]
    %v84 = vld [vmem:[#allocation7 + $0x70] sm:$0xff]
    %v85 = vld [vmem:[#allocation7 + $0x78] sm:$0xff]
    %v86 = vld [vmem:[#allocation7 + $0x80] sm:$0xff]
    %v87 = vld [vmem:[#allocation7 + $0x88] sm:$0xff]
    %v88 = vld [vmem:[#allocation7 + $0x90] sm:$0xff]
    %v89 = vld [vmem:[#allocation7 + $0x98] sm:$0xff]
    %v90 = vld [vmem:[#allocation7 + $0xa0] sm:$0xff]
    %v91 = vld [vmem:[#allocation7 + $0xa8] sm:$0xff]
    %v92 = vld [vmem:[#allocation7 + $0xb0] sm:$0xff]
    %v93 = vld [vmem:[#allocation7 + $0xb8] sm:$0xff]
    %v94 = vld [vmem:[#allocation7 + $0xc0] sm:$0xff]
    %v95 = vld [vmem:[#allocation7 + $0xc8] sm:$0xff]
    %v96 = vld [vmem:[#allocation7 + $0xd0] sm:$0xff]
    %v97 = vld [vmem:[#allocation7 + $0xd8] sm:$0xff]
    %v98 = vld [vmem:[#allocation7 + $0xe0] sm:$0xff]
    %v99 = vld [vmem:[#allocation7 + $0xe8] sm:$0xff]
    %v100 = vld [vmem:[#allocation7 + $0xf0] sm:$0xff]
    %v101 = vld [vmem:[#allocation7 + $0xf8] sm:$0xff]
    %v134 = vunpack.c.l.b16 %v70
    %v135 = vunpack.c.h.b16 %v70
    %v136 = vunpack.c.l.b16 %v71
    %v137 = vunpack.c.h.b16 %v71
    %v138 = vunpack.c.l.b16 %v72
    %v139 = vunpack.c.h.b16 %v72
    %v140 = vunpack.c.l.b16 %v73
    %v141 = vunpack.c.h.b16 %v73
    %v142 = vunpack.c.l.b16 %v74
    %v143 = vunpack.c.h.b16 %v74
    %v144 = vunpack.c.l.b16 %v75
    %v145 = vunpack.c.h.b16 %v75
    %v146 = vunpack.c.l.b16 %v76
    %v147 = vunpack.c.h.b16 %v76
    %v148 = vunpack.c.l.b16 %v77
    %v149 = vunpack.c.h.b16 %v77
    %v150 = vunpack.c.l.b16 %v78
    %v151 = vunpack.c.h.b16 %v78
    %v152 = vunpack.c.l.b16 %v79
    %v153 = vunpack.c.h.b16 %v79
    %v154 = vunpack.c.l.b16 %v80
    %v155 = vunpack.c.h.b16 %v80
    %v156 = vunpack.c.l.b16 %v81
    %v157 = vunpack.c.h.b16 %v81
    %v158 = vunpack.c.l.b16 %v82
    %v159 = vunpack.c.h.b16 %v82
    %v160 = vunpack.c.l.b16 %v83
    %v161 = vunpack.c.h.b16 %v83
    %v162 = vunpack.c.l.b16 %v84
    %v163 = vunpack.c.h.b16 %v84
    %v164 = vunpack.c.l.b16 %v85
    %v165 = vunpack.c.h.b16 %v85
    %v166 = vunpack.c.l.b16 %v86
    %v167 = vunpack.c.h.b16 %v86
    %v168 = vunpack.c.l.b16 %v87
    %v169 = vunpack.c.h.b16 %v87
    %v170 = vunpack.c.l.b16 %v88
    %v171 = vunpack.c.h.b16 %v88
    %v172 = vunpack.c.l.b16 %v89
    %v173 = vunpack.c.h.b16 %v89
    %v174 = vunpack.c.l.b16 %v90
    %v175 = vunpack.c.h.b16 %v90
    %v176 = vunpack.c.l.b16 %v91
    %v177 = vunpack.c.h.b16 %v91
    %v178 = vunpack.c.l.b16 %v92
    %v179 = vunpack.c.h.b16 %v92
    %v180 = vunpack.c.l.b16 %v93
    %v181 = vunpack.c.h.b16 %v93
    %v182 = vunpack.c.l.b16 %v94
    %v183 = vunpack.c.h.b16 %v94
    %v184 = vunpack.c.l.b16 %v95
    %v185 = vunpack.c.h.b16 %v95
    %v186 = vunpack.c.l.b16 %v96
    %v187 = vunpack.c.h.b16 %v96
    %v188 = vunpack.c.l.b16 %v97
    %v189 = vunpack.c.h.b16 %v97
    %v190 = vunpack.c.l.b16 %v98
    %v191 = vunpack.c.h.b16 %v98
    %v192 = vunpack.c.l.b16 %v99
    %v193 = vunpack.c.h.b16 %v99
    %v194 = vunpack.c.l.b16 %v100
    %v195 = vunpack.c.h.b16 %v100
    %v196 = vunpack.c.l.b16 %v101
    %v197 = vunpack.c.h.b16 %v101
    %v198 = vpack.c.b16 %v138, %v134
    %v199 = vpack.c.b16 %v139, %v135
    %v200 = vpack.c.b16 %v140, %v136
    %v201 = vpack.c.b16 %v141, %v137
    %v202 = vpack.c.b16 %v146, %v142
    %v203 = vpack.c.b16 %v147, %v143
    %v204 = vpack.c.b16 %v148, %v144
    %v205 = vpack.c.b16 %v149, %v145
    %v206 = vpack.c.b16 %v154, %v150
    %v207 = vpack.c.b16 %v155, %v151
    %v208 = vpack.c.b16 %v156, %v152
    %v209 = vpack.c.b16 %v157, %v153
    %v210 = vpack.c.b16 %v162, %v158
    %v211 = vpack.c.b16 %v163, %v159
    %v212 = vpack.c.b16 %v164, %v160
    %v213 = vpack.c.b16 %v165, %v161
    %v214 = vpack.c.b16 %v170, %v166
    %v215 = vpack.c.b16 %v171, %v167
    %v216 = vpack.c.b16 %v172, %v168
    %v217 = vpack.c.b16 %v173, %v169
    %v218 = vpack.c.b16 %v178, %v174
    %v219 = vpack.c.b16 %v179, %v175
    %v220 = vpack.c.b16 %v180, %v176
    %v221 = vpack.c.b16 %v181, %v177
    %v222 = vpack.c.b16 %v186, %v182
    %v223 = vpack.c.b16 %v187, %v183
    %v224 = vpack.c.b16 %v188, %v184
    %v225 = vpack.c.b16 %v189, %v185
    %v226 = vpack.c.b16 %v194, %v190
    %v227 = vpack.c.b16 %v195, %v191
    %v228 = vpack.c.b16 %v196, %v192
    %v229 = vpack.c.b16 %v197, %v193
    %262 = vmatpush.bf16.msra.mxu0 %v226
    %263 = vmatpush.bf16.msra.mxu0 %v222
    %264 = vmatpush.bf16.msra.mxu0 %v218
    %265 = vmatpush.bf16.msra.mxu0 %v214
    %266 = vmatpush.bf16.msra.mxu0 %v210
    %267 = vmatpush.bf16.msra.mxu0 %v206
    %268 = vmatpush.bf16.msra.mxu0 %v202
    %269 = vmatpush.bf16.msra.mxu0 %v198
    %270 = vmatmul.bf16.gmra.mxu0 %v69
    %v271 = vpop.f32.mrf.mxu0
    %v272 = vadd.f32 0.0, %v271
    %v273 = vpop.f32.mrf.mxu0
    %274 = vdwg.mxu0
    %275 = vmatpush.bf16.msra.mxu0 %v227
    %276 = vmatpush.bf16.msra.mxu0 %v223
    %277 = vmatpush.bf16.msra.mxu0 %v219
    %278 = vmatpush.bf16.msra.mxu0 %v215
    %279 = vmatpush.bf16.msra.mxu0 %v211
    %280 = vmatpush.bf16.msra.mxu0 %v207
    %281 = vmatpush.bf16.msra.mxu0 %v203
    %282 = vmatpush.bf16.msra.mxu0 %v199
    %283 = vmatmul.bf16.gmra.mxu0 %v69
    %v284 = vpop.f32.mrf.mxu0
    %v285 = vadd.f32 0.0, %v284
    %v286 = vpop.f32.mrf.mxu0
    %287 = vdwg.mxu0
    %288 = vmatpush.bf16.msra.mxu0 %v228
    %289 = vmatpush.bf16.msra.mxu0 %v224
    %290 = vmatpush.bf16.msra.mxu0 %v220
    %291 = vmatpush.bf16.msra.mxu0 %v216
    %292 = vmatpush.bf16.msra.mxu0 %v212
    %293 = vmatpush.bf16.msra.mxu0 %v208
    %294 = vmatpush.bf16.msra.mxu0 %v204
    %295 = vmatpush.bf16.msra.mxu0 %v200
    %296 = vmatmul.bf16.gmra.mxu0 %v69
    %v297 = vpop.f32.mrf.mxu0
    %v298 = vadd.f32 0.0, %v297
    %v299 = vpop.f32.mrf.mxu0
    %300 = vdwg.mxu0
    %301 = vmatpush.bf16.msra.mxu0 %v229
    %302 = vmatpush.bf16.msra.mxu0 %v225
    %303 = vmatpush.bf16.msra.mxu0 %v221
    %304 = vmatpush.bf16.msra.mxu0 %v217
    %305 = vmatpush.bf16.msra.mxu0 %v213
    %306 = vmatpush.bf16.msra.mxu0 %v209
    %307 = vmatpush.bf16.msra.mxu0 %v205
    %308 = vmatpush.bf16.msra.mxu0 %v201
    %309 = vmatmul.bf16.gmra.mxu0 %v69
    %v310 = vpop.f32.mrf.mxu0
    %v311 = vadd.f32 0.0, %v310
    %v312 = vpop.f32.mrf.mxu0
    %313 = vdwg.mxu0
    %v314 = vadd.f32 %v64, %v272
    %v315 = vadd.f32 %v65, %v285
    %v316 = vadd.f32 %v66, %v298
    %v317 = vadd.f32 %v67, %v311
    %v318 = vxor.u32 %v314, 2147483648
    %v319 = vmul.f32 %v318, 1.442695
    %v320 = vpow.pop %v319
    %v321 = vadd.f32 %v320, 1.0
    %v322 = vrcp.pop %v321
    %v323 = vmul.f32 %v321, %v322
    %v324 = vsub.f32 1.0, %v323
    %v325 = vmul.f32 %v322, %v324
    %v326 = vadd.f32 %v322, %v325
    %vm327 = vweird.f32 %v321
    %vm328 = vweird.f32 %v322
    %vm329 = vmor %vm327, %vm328
    %v330 = vsel %vm329, %v322, %v326
    %v331 = vand.u32 2147483647, %v321
    %vm332 = vcmp.eq.f32.partialorder %v331, 8.507059e+37
    %v333 = vand.u32 %v321, 2147483648
    %v334 = vor.u32 1.1754944e-38, %v333
    %v335 = vsel %vm332, %v334, %v330
    %v336 = vmul.f32 1.0, %v335
    %v337 = vxor.u32 %v315, 2147483648
    %v338 = vmul.f32 %v337, 1.442695
    %v339 = vpow.pop %v338
    %v340 = vadd.f32 %v339, 1.0
    %v341 = vrcp.pop %v340
    %v342 = vmul.f32 %v340, %v341
    %v343 = vsub.f32 1.0, %v342
    %v344 = vmul.f32 %v341, %v343
    %v345 = vadd.f32 %v341, %v344
    %vm346 = vweird.f32 %v340
    %vm347 = vweird.f32 %v341
    %vm348 = vmor %vm346, %vm347
    %v349 = vsel %vm348, %v341, %v345
    %v350 = vand.u32 2147483647, %v340
    %vm351 = vcmp.eq.f32.partialorder %v350, 8.507059e+37
    %v352 = vand.u32 %v340, 2147483648
    %v353 = vor.u32 1.1754944e-38, %v352
    %v354 = vsel %vm351, %v353, %v349
    %v355 = vmul.f32 1.0, %v354
    %v356 = vtanh.pop %v316
    %v357 = vxor.u32 %v317, 2147483648
    %v358 = vmul.f32 %v357, 1.442695
    %v359 = vpow.pop %v358
    %v360 = vadd.f32 %v359, 1.0
    %v361 = vrcp.pop %v360
    %v362 = vmul.f32 %v360, %v361
    %v363 = vsub.f32 1.0, %v362
    %v364 = vmul.f32 %v361, %v363
    %v365 = vadd.f32 %v361, %v364
    %vm366 = vweird.f32 %v360
    %vm367 = vweird.f32 %v361
    %vm368 = vmor %vm366, %vm367
    %v369 = vsel %vm368, %v361, %v365
    %v370 = vand.u32 2147483647, %v360
    %vm371 = vcmp.eq.f32.partialorder %v370, 8.507059e+37
    %v372 = vand.u32 %v360, 2147483648
    %v373 = vor.u32 1.1754944e-38, %v372
    %v374 = vsel %vm371, %v373, %v369
    %v375 = vmul.f32 1.0, %v374
    %v376 = vld [vmem:[#allocation5] sm:$0xff]
    %v377 = vmul.f32 %v355, %v376
    %v378 = vmul.f32 %v336, %v356
    %v379 = vadd.f32 %v377, %v378
    %v380 = vtanh.pop %v379
    %v381 = vmul.f32 %v375, %v380
    %382 = vst [vmem:[#allocation8] sm:$0xff] %v381
    %383 = vst [vmem:[#allocation9] sm:$0xff] %v379
    // Predicated region
    $region30: #{tpu_custom_call.1} parent=1 // pred_check
      _
    $region31: #{tpu_custom_call.1} parent=1 // pred_check_branch
      %385 = sbr.rel (0) target = $region33
    $region32: #{tpu_custom_call.1} parent=1 // pred_region
      %387 = vsyncadd [#allocation4], 0
      %s389 = sshll.u32 [#allocation8], 4
      %s390 = int_to_ptr.vmem [resolvable:$true] %s389
      %s391 = sshll.u32 %s4, 4
      %s392 = int_to_ptr.hbm [resolvable:$true] %s391
      %394 = dma.vmem_to_hbm [thread:$0]  %s390, 128, %s392, [#allocation4]
    $region33: #{tpu_custom_call.1} parent=1 // pred_fallthru
      _
    // Predicated region
    $region34: #{tpu_custom_call.1} parent=1 // pred_check
      _
    $region35: #{tpu_custom_call.1} parent=1 // pred_check_branch
      %396 = sbr.rel (0) target = $region37
    $region36: #{tpu_custom_call.1} parent=1 // pred_region
      %398 = vsyncadd [#allocation10], 0
      %s400 = sshll.u32 [#allocation9], 4
      %s401 = int_to_ptr.vmem [resolvable:$true] %s400
      %s402 = sshll.u32 %s5, 4
      %s403 = int_to_ptr.hbm [resolvable:$true] %s402
      %405 = dma.vmem_to_hbm [thread:$0]  %s401, 128, %s403, [#allocation10]
    $region37: #{tpu_custom_call.1} parent=1 // pred_fallthru
      _
    // Predicated region
    $region38: #{tpu_custom_call.1} parent=1 // pred_check
      _
    $region39: #{tpu_custom_call.1} parent=1 // pred_check_branch
      %407 = sbr.rel (0) target = $region41
    $region40: #{tpu_custom_call.1} parent=1 // pred_region
      %409 = dma.done [#allocation4], 128
    $region41: #{tpu_custom_call.1} parent=1 // pred_fallthru
      _
    // Predicated region
    $region42: #{tpu_custom_call.1} parent=1 // pred_check
      _
    $region43: #{tpu_custom_call.1} parent=1 // pred_check_branch
      %411 = sbr.rel (0) target = $region45
    $region44: #{tpu_custom_call.1} parent=1 // pred_region
      %413 = dma.done [#allocation10], 128
    $region45: #{tpu_custom_call.1} parent=1 // pred_fallthru
      _
    %414 = vsyncpa [#allocation3], 1
    %415 = vsyncpa [#allocation6], 1
    %416 = vsyncpa [#allocation4], 1
    %417 = vsyncpa [#allocation10], 1

</llo_original>
